<compile_context>
chip_gen: v7x
topology: tpu7x:2x2x1
jax: 0.10.0
libtpu: 0.0.40
codegen_flags: <defaults>
</compile_context>

<pallas_src>
import functools

import jax
import jax.numpy as jnp
from jax.experimental import pallas as pl
from jax.experimental.pallas import tpu as pltpu

LEAKY_SLOPE = 0.01   # PyTorch nn.LeakyReLU default negative_slope
LANE = 128
SUBLANE = 8

HID1 = 512           # trunk hidden 1
HID2 = 256           # trunk hidden 2 ("share")
HEAD_HID = 128       # per-head hidden
HEAD_PAD = 128       # lane-dense padded width of each head's output


def _round_up(x, m):
    return (x + m - 1) // m * m


def _leaky_relu(x):
    # slope > 0  =>  max(x, slope * x) == LeakyReLU(x)  (single VPU max)
    return jnp.maximum(x, LEAKY_SLOPE * x)


# ---------------------------------------------------------------------------
# Fused kernel: trunk + all discrete heads in one launch.
# All weights live in VMEM for the whole call (<1 MiB total in bf16).
# ---------------------------------------------------------------------------
def _fused_kernel(x_ref, w1_ref, b1_ref, w2_ref, b2_ref,
                  wh1_ref, bh1_ref, wh2_ref, bh2_ref,
                  share_ref, heads_ref, *, num_heads):
    # trunk: in -> 512 -> 256, LeakyReLU after each Linear
    x = x_ref[...].astype(jnp.bfloat16)
    h = jnp.dot(x, w1_ref[...], preferred_element_type=jnp.float32) + b1_ref[...]
    h = _leaky_relu(h)                                            # f32 activation math
    s = jnp.dot(h.astype(jnp.bfloat16), w2_ref[...],
                preferred_element_type=jnp.float32) + b2_ref[...]
    share = _leaky_relu(s)
    share_ref[...] = share

    # all heads' first layers as ONE wide matmul: (Bt,256) @ (256, 128*H)
    hh = jnp.dot(share.astype(jnp.bfloat16), wh1_ref[...],
                 preferred_element_type=jnp.float32) + bh1_ref[...]
    hh = _leaky_relu(hh)

    # per-head lane-dense (padded to 128) output projections
    for i in range(num_heads):
        hi = hh[:, i * HEAD_HID:(i + 1) * HEAD_HID].astype(jnp.bfloat16)
        yi = jnp.dot(hi, wh2_ref[i], preferred_element_type=jnp.float32) + bh2_ref[i]
        heads_ref[:, i * HEAD_PAD:(i + 1) * HEAD_PAD] = yi


# ---------------------------------------------------------------------------
# Module: parameter construction + forward (single fused kernel dispatch)
# ---------------------------------------------------------------------------
class FCModule:
    def __init__(self, input_dim, discrete_sizes, key):
        self.input_dim = input_dim
        self.discrete_sizes = list(discrete_sizes)
        self.k1 = _round_up(input_dim, LANE)        # padded contraction dim for layer 1

        def linear_params(key, fan_in, fan_out):
            # Deterministic PyTorch-style uniform init, stored (in, out).
            kw, kb = jax.random.split(key)
            bound = 1.0 / float(fan_in) ** 0.5
            w = jax.random.uniform(kw, (fan_in, fan_out), jnp.float32, -bound, bound)
            b = jax.random.uniform(kb, (1, fan_out), jnp.float32, -bound, bound)
            return w, b

        keys = jax.random.split(key, 2 + 2 * len(self.discrete_sizes))
        # logical (unpadded, f32) parameters -- used by the reference
        self.w1, self.b1 = linear_params(keys[0], input_dim, HID1)
        self.w2, self.b2 = linear_params(keys[1], HID1, HID2)
        self.heads = []
        for i, n in enumerate(self.discrete_sizes):
            hw1, hb1 = linear_params(keys[2 + 2 * i], HID2, HEAD_HID)
            hw2, hb2 = linear_params(keys[3 + 2 * i], HEAD_HID, n)
            self.heads.append((hw1, hb1, hw2, hb2))

        # ----- kernel-side parameters (padded, bf16 weights / f32 biases) -----
        H = len(self.discrete_sizes)
        self.w1_p = jnp.pad(self.w1, ((0, self.k1 - input_dim), (0, 0))).astype(jnp.bfloat16)
        self.w2_p = self.w2.astype(jnp.bfloat16)
        # all head layer-1 weights fused into one wide matrix (256, 128*H)
        self.wh1_cat = jnp.concatenate([h[0] for h in self.heads], axis=1).astype(jnp.bfloat16)
        self.bh1_cat = jnp.concatenate([h[1] for h in self.heads], axis=1)
        # head layer-2 weights padded to lane-dense 128 outputs, stacked (H,128,128)
        self.wh2_stack = jnp.stack(
            [jnp.pad(h[2], ((0, 0), (0, HEAD_PAD - h[2].shape[1]))) for h in self.heads]
        ).astype(jnp.bfloat16)
        self.bh2_stack = jnp.stack(
            [jnp.pad(h[3], ((0, 0), (0, HEAD_PAD - h[3].shape[1]))) for h in self.heads]
        )  # (H, 1, 128) f32

    def _fused_call(self, xp, bp, bt):
        H = len(self.discrete_sizes)
        k1 = self.k1
        kernel = functools.partial(_fused_kernel, num_heads=H)
        share, heads = pl.pallas_call(
            kernel,
            out_shape=(
                jax.ShapeDtypeStruct((bp, HID2), jnp.float32),
                jax.ShapeDtypeStruct((bp, HEAD_PAD * H), jnp.float32),
            ),
            grid=(bp // bt,),
            in_specs=[
                pl.BlockSpec((bt, k1), lambda i: (i, 0)),                    # x (batch-tiled)
                pl.BlockSpec((k1, HID1), lambda i: (0, 0)),                  # w1
                pl.BlockSpec((1, HID1), lambda i: (0, 0)),                   # b1
                pl.BlockSpec((HID1, HID2), lambda i: (0, 0)),                # w2
                pl.BlockSpec((1, HID2), lambda i: (0, 0)),                   # b2
                pl.BlockSpec((HID2, HEAD_HID * H), lambda i: (0, 0)),        # wh1 (all heads)
                pl.BlockSpec((1, HEAD_HID * H), lambda i: (0, 0)),           # bh1 (all heads)
                pl.BlockSpec((H, HEAD_HID, HEAD_PAD), lambda i: (0, 0, 0)),  # wh2 stack
                pl.BlockSpec((H, 1, HEAD_PAD), lambda i: (0, 0, 0)),         # bh2 stack
            ],
            out_specs=(
                pl.BlockSpec((bt, HID2), lambda i: (i, 0)),                  # share
                pl.BlockSpec((bt, HEAD_PAD * H), lambda i: (i, 0)),          # heads slab
            ),
            compiler_params=pltpu.CompilerParams(
                dimension_semantics=("parallel",)),
        )(xp, self.w1_p, self.b1, self.w2_p, self.b2,
          self.wh1_cat, self.bh1_cat, self.wh2_stack, self.bh2_stack)
        return share, heads

    def forward(self, x):
        batch = x.shape[0]
        # batch tiling: single tile for small batch, 128-row tiles (parallel
        # across v7x's two TensorCores) for large batch.
        if batch <= 128:
            bp = _round_up(batch, SUBLANE)
            bt = bp
        else:
            bt = 128
            bp = _round_up(batch, bt)
        xp = jnp.pad(x, ((0, bp - batch), (0, self.k1 - self.input_dim)))

        share, heads = self._fused_call(xp, bp, bt)

        self.share = share[:batch]
        discrete = [
            heads[:batch, i * HEAD_PAD:i * HEAD_PAD + n]
            for i, n in enumerate(self.discrete_sizes)
        ]
        # TODO(synk): optional nn.LSTM branch (model.lstm) not implemented; default config disables it.
        return dict(discrete=discrete)


# ---------------------------------------------------------------------------
# Pure-JAX reference (mirrors the kernel numerics: bf16 matmul inputs,
# f32 accumulation and f32 activation math).
# ---------------------------------------------------------------------------
def _reference_forward(module, x):
    def bdot(a, w):
        return jnp.dot(a.astype(jnp.bfloat16), w.astype(jnp.bfloat16),
                       preferred_element_type=jnp.float32)

    def lrelu(v):
        return jnp.maximum(v, LEAKY_SLOPE * v)

    h = lrelu(bdot(x, module.w1) + module.b1)
    s = lrelu(bdot(h, module.w2) + module.b2)
    outs = []
    for hw1, hb1, hw2, hb2 in module.heads:
        t = lrelu(bdot(s, hw1) + hb1)
        outs.append(bdot(t, hw2) + hb2)
    return s, outs


if __name__ == "__main__":
    key = jax.random.PRNGKey(0)
    k_param, k_x = jax.random.split(key)

    batch = 8
    input_dim = 115          # gfootball 'simple115' style flat observation
    discrete_sizes = [19, 10]  # two discrete heads (exercises fused multi-head path)

    module = FCModule(input_dim, discrete_sizes, k_param)
    x = jax.random.normal(k_x, (batch, input_dim), jnp.float32)

    out = module.forward(x)
    for arr in out["discrete"]:
        jax.block_until_ready(arr)
    jax.block_until_ready(module.share)

    # sanity-check against pure-JAX reference
    ref_share, ref_heads = _reference_forward(module, x)
    assert module.share.shape == ref_share.shape
    assert jnp.allclose(module.share, ref_share, atol=1e-3, rtol=1e-3)
    for a, b in zip(out["discrete"], ref_heads):
        assert a.shape == b.shape
        assert jnp.allclose(a, b, atol=1e-3, rtol=1e-3)

    print("KERNEL_OK")
</pallas_src>

<mosaic_0001>
module attributes {stable_mosaic.version = 11 : i64} {
  func.func @_fused_kernel(%arg0: i32, %arg1: memref<8x128xf32, #tpu.memory_space<vmem>>, %arg2: memref<128x512xbf16, #tpu.memory_space<vmem>>, %arg3: memref<1x512xf32, #tpu.memory_space<vmem>>, %arg4: memref<512x256xbf16, #tpu.memory_space<vmem>>, %arg5: memref<1x256xf32, #tpu.memory_space<vmem>>, %arg6: memref<256x256xbf16, #tpu.memory_space<vmem>>, %arg7: memref<1x256xf32, #tpu.memory_space<vmem>>, %arg8: memref<2x128x128xbf16, #tpu.memory_space<vmem>>, %arg9: memref<2x1x128xf32, #tpu.memory_space<vmem>>, %arg10: memref<8x256xf32, #tpu.memory_space<vmem>>, %arg11: memref<8x256xf32, #tpu.memory_space<vmem>>) attributes {dimension_semantics = [#tpu.dimension_semantics<parallel>], iteration_bounds = array<i64: 1>, scalar_prefetch = 0 : i64, scratch_operands = 0 : i64, tpu.core_type = #tpu.core_type<tc>, window_params = [{transform_indices = @transform_0, window_bounds = array<i64: 8, 128>}, {pipeline_mode = #tpu.pipeline_mode<synchronous>, transform_indices = @transform_1, window_bounds = array<i64: 128, 512>}, {pipeline_mode = #tpu.pipeline_mode<synchronous>, transform_indices = @transform_2, window_bounds = array<i64: 1, 512>}, {pipeline_mode = #tpu.pipeline_mode<synchronous>, transform_indices = @transform_3, window_bounds = array<i64: 512, 256>}, {pipeline_mode = #tpu.pipeline_mode<synchronous>, transform_indices = @transform_4, window_bounds = array<i64: 1, 256>}, {pipeline_mode = #tpu.pipeline_mode<synchronous>, transform_indices = @transform_5, window_bounds = array<i64: 256, 256>}, {pipeline_mode = #tpu.pipeline_mode<synchronous>, transform_indices = @transform_6, window_bounds = array<i64: 1, 256>}, {pipeline_mode = #tpu.pipeline_mode<synchronous>, transform_indices = @transform_7, window_bounds = array<i64: 2, 128, 128>}, {pipeline_mode = #tpu.pipeline_mode<synchronous>, transform_indices = @transform_8, window_bounds = array<i64: 2, 1, 128>}, {transform_indices = @transform_9, window_bounds = array<i64: 8, 256>}, {transform_indices = @transform_10, window_bounds = array<i64: 8, 256>}]} {
    %c0 = arith.constant 0 : index
    %c0_0 = arith.constant 0 : index
    %0 = vector.load %arg1[%c0, %c0_0] : memref<8x128xf32, #tpu.memory_space<vmem>>, vector<8x128xf32>
    %1 = arith.truncf %0 : vector<8x128xf32> to vector<8x128xbf16>
    %c0_1 = arith.constant 0 : index
    %c0_2 = arith.constant 0 : index
    %2 = vector.load %arg2[%c0_1, %c0_2] : memref<128x512xbf16, #tpu.memory_space<vmem>>, vector<128x512xbf16>
    %cst = arith.constant dense<0.000000e+00> : vector<8x512xf32>
    %3 = tpu.matmul %1, %2, %cst {dimension_numbers = #tpu.dot_dimension_numbers<[1], [0], [0], [1], [0, 0, 1, 1], [], []>} : vector<8x128xbf16>, vector<128x512xbf16>, vector<8x512xf32> -> vector<8x512xf32>
    %c0_3 = arith.constant 0 : index
    %c0_4 = arith.constant 0 : index
    %4 = vector.load %arg3[%c0_3, %c0_4] : memref<1x512xf32, #tpu.memory_space<vmem>>, vector<1x512xf32>
    %5 = vector.broadcast %4 : vector<1x512xf32> to vector<8x512xf32>
    %6 = arith.addf %3, %5 : vector<8x512xf32>
    %cst_5 = arith.constant 0.00999999977 : f32
    %7 = vector.broadcast %cst_5 : f32 to vector<8x512xf32>
    %8 = arith.mulf %7, %6 : vector<8x512xf32>
    %9 = arith.maximumf %6, %8 : vector<8x512xf32>
    %10 = arith.truncf %9 : vector<8x512xf32> to vector<8x512xbf16>
    %c0_6 = arith.constant 0 : index
    %c0_7 = arith.constant 0 : index
    %11 = vector.load %arg4[%c0_6, %c0_7] : memref<512x256xbf16, #tpu.memory_space<vmem>>, vector<512x256xbf16>
    %cst_8 = arith.constant dense<0.000000e+00> : vector<8x256xf32>
    %12 = tpu.matmul %10, %11, %cst_8 {dimension_numbers = #tpu.dot_dimension_numbers<[1], [0], [0], [1], [0, 0, 1, 1], [], []>} : vector<8x512xbf16>, vector<512x256xbf16>, vector<8x256xf32> -> vector<8x256xf32>
    %c0_9 = arith.constant 0 : index
    %c0_10 = arith.constant 0 : index
    %13 = vector.load %arg5[%c0_9, %c0_10] : memref<1x256xf32, #tpu.memory_space<vmem>>, vector<1x256xf32>
    %14 = vector.broadcast %13 : vector<1x256xf32> to vector<8x256xf32>
    %15 = arith.addf %12, %14 : vector<8x256xf32>
    %cst_11 = arith.constant 0.00999999977 : f32
    %16 = vector.broadcast %cst_11 : f32 to vector<8x256xf32>
    %17 = arith.mulf %16, %15 : vector<8x256xf32>
    %18 = arith.maximumf %15, %17 : vector<8x256xf32>
    %c0_12 = arith.constant 0 : index
    %c0_13 = arith.constant 0 : index
    %19 = vector.load %arg10[%c0_12, %c0_13] : memref<8x256xf32, #tpu.memory_space<vmem>>, vector<8x256xf32>
    tpu.vector_store %arg10[%c0_12, %c0_13], %18 {strides = array<i32>} : memref<8x256xf32, #tpu.memory_space<vmem>>, vector<8x256xf32>,
    %20 = arith.truncf %18 : vector<8x256xf32> to vector<8x256xbf16>
    %c0_14 = arith.constant 0 : index
    %c0_15 = arith.constant 0 : index
    %21 = vector.load %arg6[%c0_14, %c0_15] : memref<256x256xbf16, #tpu.memory_space<vmem>>, vector<256x256xbf16>
    %cst_16 = arith.constant dense<0.000000e+00> : vector<8x256xf32>
    %22 = tpu.matmul %20, %21, %cst_16 {dimension_numbers = #tpu.dot_dimension_numbers<[1], [0], [0], [1], [0, 0, 1, 1], [], []>} : vector<8x256xbf16>, vector<256x256xbf16>, vector<8x256xf32> -> vector<8x256xf32>
    %c0_17 = arith.constant 0 : index
    %c0_18 = arith.constant 0 : index
    %23 = vector.load %arg7[%c0_17, %c0_18] : memref<1x256xf32, #tpu.memory_space<vmem>>, vector<1x256xf32>
    %24 = vector.broadcast %23 : vector<1x256xf32> to vector<8x256xf32>
    %25 = arith.addf %22, %24 : vector<8x256xf32>
    %cst_19 = arith.constant 0.00999999977 : f32
    %26 = vector.broadcast %cst_19 : f32 to vector<8x256xf32>
    %27 = arith.mulf %26, %25 : vector<8x256xf32>
    %28 = arith.maximumf %25, %27 : vector<8x256xf32>
    %29 = vector.extract_strided_slice %28 {offsets = [0, 0], sizes = [8, 128], strides = [1, 1]} : vector<8x256xf32> to vector<8x128xf32>
    %30 = arith.truncf %29 : vector<8x128xf32> to vector<8x128xbf16>
    %c0_20 = arith.constant 0 : index
    %c0_21 = arith.constant 0 : index
    %c0_22 = arith.constant 0 : index
    %31 = vector.load %arg8[%c0_20, %c0_21, %c0_22] : memref<2x128x128xbf16, #tpu.memory_space<vmem>>, vector<1x128x128xbf16>
    %32 = vector.shape_cast %31 : vector<1x128x128xbf16> to vector<128x128xbf16>
    %cst_23 = arith.constant dense<0.000000e+00> : vector<8x128xf32>
    %33 = tpu.matmul %30, %32, %cst_23 {dimension_numbers = #tpu.dot_dimension_numbers<[1], [0], [0], [1], [0, 0, 1, 1], [], []>} : vector<8x128xbf16>, vector<128x128xbf16>, vector<8x128xf32> -> vector<8x128xf32>
    %c0_24 = arith.constant 0 : index
    %c0_25 = arith.constant 0 : index
    %c0_26 = arith.constant 0 : index
    %34 = vector.load %arg9[%c0_24, %c0_25, %c0_26] : memref<2x1x128xf32, #tpu.memory_space<vmem>>, vector<1x1x128xf32>
    %35 = vector.shape_cast %34 : vector<1x1x128xf32> to vector<1x128xf32>
    %36 = vector.broadcast %35 : vector<1x128xf32> to vector<8x128xf32>
    %37 = arith.addf %33, %36 : vector<8x128xf32>
    %c0_27 = arith.constant 0 : index
    %c0_28 = arith.constant 0 : index
    %38 = vector.load %arg11[%c0_27, %c0_28] : memref<8x256xf32, #tpu.memory_space<vmem>>, vector<8x128xf32>
    tpu.vector_store %arg11[%c0_27, %c0_28], %37 {strides = array<i32>} : memref<8x256xf32, #tpu.memory_space<vmem>>, vector<8x128xf32>,
    %39 = vector.extract_strided_slice %28 {offsets = [0, 128], sizes = [8, 128], strides = [1, 1]} : vector<8x256xf32> to vector<8x128xf32>
    %40 = arith.truncf %39 : vector<8x128xf32> to vector<8x128xbf16>
    %c1 = arith.constant 1 : index
    %c0_29 = arith.constant 0 : index
    %c0_30 = arith.constant 0 : index
    %41 = vector.load %arg8[%c1, %c0_29, %c0_30] : memref<2x128x128xbf16, #tpu.memory_space<vmem>>, vector<1x128x128xbf16>
    %42 = vector.shape_cast %41 : vector<1x128x128xbf16> to vector<128x128xbf16>
    %cst_31 = arith.constant dense<0.000000e+00> : vector<8x128xf32>
    %43 = tpu.matmul %40, %42, %cst_31 {dimension_numbers = #tpu.dot_dimension_numbers<[1], [0], [0], [1], [0, 0, 1, 1], [], []>} : vector<8x128xbf16>, vector<128x128xbf16>, vector<8x128xf32> -> vector<8x128xf32>
    %c1_32 = arith.constant 1 : index
    %c0_33 = arith.constant 0 : index
    %c0_34 = arith.constant 0 : index
    %44 = vector.load %arg9[%c1_32, %c0_33, %c0_34] : memref<2x1x128xf32, #tpu.memory_space<vmem>>, vector<1x1x128xf32>
    %45 = vector.shape_cast %44 : vector<1x1x128xf32> to vector<1x128xf32>
    %46 = vector.broadcast %45 : vector<1x128xf32> to vector<8x128xf32>
    %47 = arith.addf %43, %46 : vector<8x128xf32>
    %c0_35 = arith.constant 0 : index
    %c128 = arith.constant 128 : index
    %48 = vector.load %arg11[%c0_35, %c128] : memref<8x256xf32, #tpu.memory_space<vmem>>, vector<8x128xf32>
    tpu.vector_store %arg11[%c0_35, %c128], %47 {strides = array<i32>} : memref<8x256xf32, #tpu.memory_space<vmem>>, vector<8x128xf32>,
    return
  }
  func.func @transform_0(%arg0: i32) -> (i32, i32) {
    %c0_i32 = arith.constant 0 : i32
    %c0_i32_0 = arith.constant 0 : i32
    return %arg0, %c0_i32 : i32, i32
  }
  func.func @transform_1(%arg0: i32) -> (i32, i32) {
    %c0_i32 = arith.constant 0 : i32
    %c0_i32_0 = arith.constant 0 : i32
    %c0_i32_1 = arith.constant 0 : i32
    return %c0_i32, %c0_i32_0 : i32, i32
  }
  func.func @transform_2(%arg0: i32) -> (i32, i32) {
    %c0_i32 = arith.constant 0 : i32
    %c0_i32_0 = arith.constant 0 : i32
    %c0_i32_1 = arith.constant 0 : i32
    return %c0_i32, %c0_i32_0 : i32, i32
  }
  func.func @transform_3(%arg0: i32) -> (i32, i32) {
    %c0_i32 = arith.constant 0 : i32
    %c0_i32_0 = arith.constant 0 : i32
    %c0_i32_1 = arith.constant 0 : i32
    return %c0_i32, %c0_i32_0 : i32, i32
  }
  func.func @transform_4(%arg0: i32) -> (i32, i32) {
    %c0_i32 = arith.constant 0 : i32
    %c0_i32_0 = arith.constant 0 : i32
    %c0_i32_1 = arith.constant 0 : i32
    return %c0_i32, %c0_i32_0 : i32, i32
  }
  func.func @transform_5(%arg0: i32) -> (i32, i32) {
    %c0_i32 = arith.constant 0 : i32
    %c0_i32_0 = arith.constant 0 : i32
    %c0_i32_1 = arith.constant 0 : i32
    return %c0_i32, %c0_i32_0 : i32, i32
  }
  func.func @transform_6(%arg0: i32) -> (i32, i32) {
    %c0_i32 = arith.constant 0 : i32
    %c0_i32_0 = arith.constant 0 : i32
    %c0_i32_1 = arith.constant 0 : i32
    return %c0_i32, %c0_i32_0 : i32, i32
  }
  func.func @transform_7(%arg0: i32) -> (i32, i32, i32) {
    %c0_i32 = arith.constant 0 : i32
    %c0_i32_0 = arith.constant 0 : i32
    %c0_i32_1 = arith.constant 0 : i32
    %c0_i32_2 = arith.constant 0 : i32
    return %c0_i32, %c0_i32_0, %c0_i32_1 : i32, i32, i32
  }
  func.func @transform_8(%arg0: i32) -> (i32, i32, i32) {
    %c0_i32 = arith.constant 0 : i32
    %c0_i32_0 = arith.constant 0 : i32
    %c0_i32_1 = arith.constant 0 : i32
    %c0_i32_2 = arith.constant 0 : i32
    return %c0_i32, %c0_i32_0, %c0_i32_1 : i32, i32, i32
  }
  func.func @transform_9(%arg0: i32) -> (i32, i32) {
    %c0_i32 = arith.constant 0 : i32
    %c0_i32_0 = arith.constant 0 : i32
    return %arg0, %c0_i32 : i32, i32
  }
  func.func @transform_10(%arg0: i32) -> (i32, i32) {
    %c0_i32 = arith.constant 0 : i32
    %c0_i32_0 = arith.constant 0 : i32
    return %arg0, %c0_i32 : i32, i32
  }
}

</mosaic_0001>

<llo_original>
// kernel: tpu_custom_call.1
$region0: #{tpu_custom_call.1}
  #allocation0 [shape = 'u32[]', space=smem, size = 0x4, offset = 0x4, fixed_abs, tag = 'smem constant byte address 0x4 - core index']
  #allocation1 [shape = 'u32[144,128]{1,0:T(1,128)}', space=vmem, size = 0x12000, scoped, tag = 'internal scratch']
  %s0 = inlined_call_operand.hbm [shape: f32[8,128], index: 0, kind: input, shape index: {}]
  %s1 = inlined_call_operand.hbm [shape: bf16[128,512], index: 1, kind: input, shape index: {}]
  %s2 = inlined_call_operand.vmem [shape: f32[1,512], index: 2, kind: input, shape index: {}]
  %s3 = inlined_call_operand.hbm [shape: bf16[512,256], index: 3, kind: input, shape index: {}]
  %s4 = inlined_call_operand.vmem [shape: f32[1,256], index: 4, kind: input, shape index: {}]
  %s5 = inlined_call_operand.hbm [shape: bf16[256,256], index: 5, kind: input, shape index: {}]
  %s6 = inlined_call_operand.vmem [shape: f32[1,256], index: 6, kind: input, shape index: {}]
  %s7 = inlined_call_operand.hbm [shape: bf16[2,128,128], index: 7, kind: input, shape index: {}]
  %s8 = inlined_call_operand.vmem [shape: f32[2,1,128], index: 8, kind: input, shape index: {}]
  %s9 = inlined_call_operand.hbm [shape: f32[8,256], index: 9, kind: output, shape index: {0}]
  %s10 = inlined_call_operand.hbm [shape: f32[8,256], index: 10, kind: output, shape index: {1}]
  %11 = xla_tuple %s9, %s10
  %s12 = sld [smem:[#allocation0]]
  $region74: #{tpu_custom_call.1} parent=0
    _
  %s14 = ssub.s32 1, %s12
  %s15 = scalar_select 0, %s14, %s12
  $region1: #{tpu_custom_call.1} parent=0
    #allocation2 [shape = 'u8[4096]{0}', space=vmem, size = 0x1000, scoped, tag = 'input window, operand 0, single buffered']
    #allocation3 [shape = 's32[1]{0}', space=sflag, size = 0x4, scoped, tag = 'scoped memory for tpu_custom_call.1']
    #allocation4 [shape = 's32[1]{0}', space=sflag, size = 0x4, scoped, tag = 'scoped memory for tpu_custom_call.1']
    #allocation5 [shape = 'u8[131072]{0}', space=vmem, size = 0x20000, scoped, tag = 'input window, operand 1, single buffered']
    #allocation6 [shape = 's32[1]{0}', space=sflag, size = 0x4, scoped, tag = 'scoped memory for tpu_custom_call.1']
    #allocation7 [shape = 'u8[262144]{0}', space=vmem, size = 0x40000, scoped, tag = 'input window, operand 3, single buffered']
    #allocation8 [shape = 'u8[131072]{0}', space=vmem, size = 0x20000, scoped, tag = 'input window, operand 5, single buffered']
    #allocation9 [shape = 's32[1]{0}', space=sflag, size = 0x4, scoped, tag = 'scoped memory for tpu_custom_call.1']
    #allocation10 [shape = 'u8[65536]{0}', space=vmem, size = 0x10000, scoped, tag = 'input window, operand 7, single buffered']
    #allocation11 [shape = 'u8[8192]{0}', space=vmem, size = 0x2000, scoped, tag = 'output window, operand 0, single buffered']
    #allocation12 [shape = 'u8[8192]{0}', space=vmem, size = 0x2000, scoped, tag = 'output window, operand 1, single buffered']
    #allocation13 [shape = 's32[1]{0}', space=sflag, size = 0x4, scoped, tag = 'scoped memory for tpu_custom_call.1']
    %16 = vsyncpa [#allocation3], 0
    %17 = vsyncpa [#allocation6], 0
    %18 = vsyncpa [#allocation9], 0
    %19 = vsyncpa [#allocation4], 0
    %20 = vsyncpa [#allocation13], 0
    // Predicated region
    $region2: #{tpu_custom_call.1} parent=1 // pred_check
      _
    $region3: #{tpu_custom_call.1} parent=1 // pred_check_branch
      %22 = sbr.rel (0) target = $region5
    $region4: #{tpu_custom_call.1} parent=1 // pred_region
      %s24 = ssub.s32 128, 128
      %25 = vsyncadd [#allocation3], %s24
      %s27 = sshll.u32 [#allocation2], 4
      %s28 = int_to_ptr.vmem [resolvable:$true] %s27
      %30 = dma.hbm_to_vmem [thread:$0]  %s0, 128, %s28, [#allocation3]
    $region5: #{tpu_custom_call.1} parent=1 // pred_fallthru
      _
    // Predicated region
    $region6: #{tpu_custom_call.1} parent=1 // pred_check
      _
    $region7: #{tpu_custom_call.1} parent=1 // pred_check_branch
      %32 = sbr.rel (0) target = $region9
    $region8: #{tpu_custom_call.1} parent=1 // pred_region
      %s34 = ssub.s32 4096, 4096
      %35 = vsyncadd [#allocation6], %s34
      %s36 = sshll.u32 [#allocation5], 4
      %s37 = int_to_ptr.vmem [resolvable:$true] %s36
      %42 = dma.hbm_to_vmem [thread:$0]  %s1, 4096, %s37, [#allocation6], 256, 256, 16
    $region9: #{tpu_custom_call.1} parent=1 // pred_fallthru
      _
    // Predicated region
    $region10: #{tpu_custom_call.1} parent=1 // pred_check
      _
    $region11: #{tpu_custom_call.1} parent=1 // pred_check_branch
      %44 = sbr.rel (0) target = $region13
    $region12: #{tpu_custom_call.1} parent=1 // pred_region
      _
    $region13: #{tpu_custom_call.1} parent=1 // pred_fallthru
      _
    // Predicated region
    $region14: #{tpu_custom_call.1} parent=1 // pred_check
      _
    $region15: #{tpu_custom_call.1} parent=1 // pred_check_branch
      %46 = sbr.rel (0) target = $region17
    $region16: #{tpu_custom_call.1} parent=1 // pred_region
      %s48 = ssub.s32 8192, 8192
      %49 = vsyncadd [#allocation6], %s48
      %s50 = sshll.u32 [#allocation7], 4
      %s51 = int_to_ptr.vmem [resolvable:$true] %s50
      %56 = dma.hbm_to_vmem [thread:$0]  %s3, 8192, %s51, [#allocation6], 128, 128, 8
    $region17: #{tpu_custom_call.1} parent=1 // pred_fallthru
      _
    // Predicated region
    $region18: #{tpu_custom_call.1} parent=1 // pred_check
      _
    $region19: #{tpu_custom_call.1} parent=1 // pred_check_branch
      %58 = sbr.rel (0) target = $region21
    $region20: #{tpu_custom_call.1} parent=1 // pred_region
      _
    $region21: #{tpu_custom_call.1} parent=1 // pred_fallthru
      _
    // Predicated region
    $region22: #{tpu_custom_call.1} parent=1 // pred_check
      _
    $region23: #{tpu_custom_call.1} parent=1 // pred_check_branch
      %60 = sbr.rel (0) target = $region25
    $region24: #{tpu_custom_call.1} parent=1 // pred_region
      %s62 = ssub.s32 4096, 4096
      %63 = vsyncadd [#allocation9], %s62
      %s64 = sshll.u32 [#allocation8], 4
      %s65 = int_to_ptr.vmem [resolvable:$true] %s64
      %70 = dma.hbm_to_vmem [thread:$0]  %s5, 4096, %s65, [#allocation9], 128, 128, 8
    $region25: #{tpu_custom_call.1} parent=1 // pred_fallthru
      _
    // Predicated region
    $region26: #{tpu_custom_call.1} parent=1 // pred_check
      _
    $region27: #{tpu_custom_call.1} parent=1 // pred_check_branch
      %72 = sbr.rel (0) target = $region29
    $region28: #{tpu_custom_call.1} parent=1 // pred_region
      _
    $region29: #{tpu_custom_call.1} parent=1 // pred_fallthru
      _
    // Predicated region
    $region30: #{tpu_custom_call.1} parent=1 // pred_check
      _
    $region31: #{tpu_custom_call.1} parent=1 // pred_check_branch
      %74 = sbr.rel (0) target = $region33
    $region32: #{tpu_custom_call.1} parent=1 // pred_region
      %s76 = ssub.s32 2048, 2048
      %77 = vsyncadd [#allocation9], %s76
      %s78 = sshll.u32 [#allocation10], 4
      %s79 = int_to_ptr.vmem [resolvable:$true] %s78
      %84 = dma.hbm_to_vmem [thread:$0]  %s7, 2048, %s79, [#allocation9], 64, 64, 4
    $region33: #{tpu_custom_call.1} parent=1 // pred_fallthru
      _
    // Predicated region
    $region34: #{tpu_custom_call.1} parent=1 // pred_check
      _
    $region35: #{tpu_custom_call.1} parent=1 // pred_check_branch
      %86 = sbr.rel (0) target = $region37
    $region36: #{tpu_custom_call.1} parent=1 // pred_region
      _
    $region37: #{tpu_custom_call.1} parent=1 // pred_fallthru
      _
    // Predicated region
    $region38: #{tpu_custom_call.1} parent=1 // pred_check
      _
    $region39: #{tpu_custom_call.1} parent=1 // pred_check_branch
      %88 = sbr.rel (0) target = $region41
    $region40: #{tpu_custom_call.1} parent=1 // pred_region
      %89 = dma.done [#allocation3], 128
    $region41: #{tpu_custom_call.1} parent=1 // pred_fallthru
      _
    // Predicated region
    $region42: #{tpu_custom_call.1} parent=1 // pred_check
      _
    $region43: #{tpu_custom_call.1} parent=1 // pred_check_branch
      %91 = sbr.rel (0) target = $region45
    $region44: #{tpu_custom_call.1} parent=1 // pred_region
      %92 = dma.done [#allocation6], 4096
    $region45: #{tpu_custom_call.1} parent=1 // pred_fallthru
      _
    // Predicated region
    $region46: #{tpu_custom_call.1} parent=1 // pred_check
      _
    $region47: #{tpu_custom_call.1} parent=1 // pred_check_branch
      %94 = sbr.rel (0) target = $region49
    $region48: #{tpu_custom_call.1} parent=1 // pred_region
      %95 = dma.done [#allocation6], 8192
    $region49: #{tpu_custom_call.1} parent=1 // pred_fallthru
      _
    // Predicated region
    $region50: #{tpu_custom_call.1} parent=1 // pred_check
      _
    $region51: #{tpu_custom_call.1} parent=1 // pred_check_branch
      %97 = sbr.rel (0) target = $region53
    $region52: #{tpu_custom_call.1} parent=1 // pred_region
      %98 = dma.done [#allocation9], 4096
    $region53: #{tpu_custom_call.1} parent=1 // pred_fallthru
      _
    // Predicated region
    $region54: #{tpu_custom_call.1} parent=1 // pred_check
      _
    $region55: #{tpu_custom_call.1} parent=1 // pred_check_branch
      %100 = sbr.rel (0) target = $region57
    $region56: #{tpu_custom_call.1} parent=1 // pred_region
      %101 = dma.done [#allocation9], 2048
    $region57: #{tpu_custom_call.1} parent=1 // pred_fallthru
      _
    %v103 = vld [vmem:[#allocation2] sm:$0xff]
    %v104 = vpack.c.bf16 %v103, %v103
    %v105 = vld [vmem:[#allocation5] sm:$0xff]
    %v106 = vld [vmem:[#allocation5 + $0x8] sm:$0xff]
    %v107 = vld [vmem:[#allocation5 + $0x10] sm:$0xff]
    %v108 = vld [vmem:[#allocation5 + $0x18] sm:$0xff]
    %v109 = vld [vmem:[#allocation5 + $0x20] sm:$0xff]
    %v110 = vld [vmem:[#allocation5 + $0x28] sm:$0xff]
    %v111 = vld [vmem:[#allocation5 + $0x30] sm:$0xff]
    %v112 = vld [vmem:[#allocation5 + $0x38] sm:$0xff]
    %v113 = vld [vmem:[#allocation5 + $0x40] sm:$0xff]
    %v114 = vld [vmem:[#allocation5 + $0x48] sm:$0xff]
    %v115 = vld [vmem:[#allocation5 + $0x50] sm:$0xff]
    %v116 = vld [vmem:[#allocation5 + $0x58] sm:$0xff]
    %v117 = vld [vmem:[#allocation5 + $0x60] sm:$0xff]
    %v118 = vld [vmem:[#allocation5 + $0x68] sm:$0xff]
    %v119 = vld [vmem:[#allocation5 + $0x70] sm:$0xff]
    %v120 = vld [vmem:[#allocation5 + $0x78] sm:$0xff]
    %v121 = vld [vmem:[#allocation5 + $0x80] sm:$0xff]
    %v122 = vld [vmem:[#allocation5 + $0x88] sm:$0xff]
    %v123 = vld [vmem:[#allocation5 + $0x90] sm:$0xff]
    %v124 = vld [vmem:[#allocation5 + $0x98] sm:$0xff]
    %v125 = vld [vmem:[#allocation5 + $0xa0] sm:$0xff]
    %v126 = vld [vmem:[#allocation5 + $0xa8] sm:$0xff]
    %v127 = vld [vmem:[#allocation5 + $0xb0] sm:$0xff]
    %v128 = vld [vmem:[#allocation5 + $0xb8] sm:$0xff]
    %v129 = vld [vmem:[#allocation5 + $0xc0] sm:$0xff]
    %v130 = vld [vmem:[#allocation5 + $0xc8] sm:$0xff]
    %v131 = vld [vmem:[#allocation5 + $0xd0] sm:$0xff]
    %v132 = vld [vmem:[#allocation5 + $0xd8] sm:$0xff]
    %v133 = vld [vmem:[#allocation5 + $0xe0] sm:$0xff]
    %v134 = vld [vmem:[#allocation5 + $0xe8] sm:$0xff]
    %v135 = vld [vmem:[#allocation5 + $0xf0] sm:$0xff]
    %v136 = vld [vmem:[#allocation5 + $0xf8] sm:$0xff]
    %v137 = vld [vmem:[%s2] sm:$0xf]
    %v139 = vlaneseq
    %v140 = vshrl.u32 %v139, 7
    %v141 = vsub.s32 0, %v140
    %v142 = vrot.slane %v137, %v141
    %v143 = vlaneseq
    %v144 = vshrl.u32 %v143, 7
    %v145 = vsub.s32 1, %v144
    %v146 = vrot.slane %v137, %v145
    %v147 = vlaneseq
    %v148 = vshrl.u32 %v147, 7
    %v149 = vsub.s32 2, %v148
    %v150 = vrot.slane %v137, %v149
    %v151 = vlaneseq
    %v152 = vshrl.u32 %v151, 7
    %v153 = vsub.s32 3, %v152
    %v154 = vrot.slane %v137, %v153
    %v191 = vunpack.c.l.b16 %v105
    %v192 = vunpack.c.h.b16 %v105
    %v193 = vunpack.c.l.b16 %v106
    %v194 = vunpack.c.h.b16 %v106
    %v195 = vunpack.c.l.b16 %v107
    %v196 = vunpack.c.h.b16 %v107
    %v197 = vunpack.c.l.b16 %v108
    %v198 = vunpack.c.h.b16 %v108
    %v199 = vunpack.c.l.b16 %v109
    %v200 = vunpack.c.h.b16 %v109
    %v201 = vunpack.c.l.b16 %v110
    %v202 = vunpack.c.h.b16 %v110
    %v203 = vunpack.c.l.b16 %v111
    %v204 = vunpack.c.h.b16 %v111
    %v205 = vunpack.c.l.b16 %v112
    %v206 = vunpack.c.h.b16 %v112
    %v207 = vunpack.c.l.b16 %v113
    %v208 = vunpack.c.h.b16 %v113
    %v209 = vunpack.c.l.b16 %v114
    %v210 = vunpack.c.h.b16 %v114
    %v211 = vunpack.c.l.b16 %v115
    %v212 = vunpack.c.h.b16 %v115
    %v213 = vunpack.c.l.b16 %v116
    %v214 = vunpack.c.h.b16 %v116
    %v215 = vunpack.c.l.b16 %v117
    %v216 = vunpack.c.h.b16 %v117
    %v217 = vunpack.c.l.b16 %v118
    %v218 = vunpack.c.h.b16 %v118
    %v219 = vunpack.c.l.b16 %v119
    %v220 = vunpack.c.h.b16 %v119
    %v221 = vunpack.c.l.b16 %v120
    %v222 = vunpack.c.h.b16 %v120
    %v223 = vunpack.c.l.b16 %v121
    %v224 = vunpack.c.h.b16 %v121
    %v225 = vunpack.c.l.b16 %v122
    %v226 = vunpack.c.h.b16 %v122
    %v227 = vunpack.c.l.b16 %v123
    %v228 = vunpack.c.h.b16 %v123
    %v229 = vunpack.c.l.b16 %v124
    %v230 = vunpack.c.h.b16 %v124
    %v231 = vunpack.c.l.b16 %v125
    %v232 = vunpack.c.h.b16 %v125
    %v233 = vunpack.c.l.b16 %v126
    %v234 = vunpack.c.h.b16 %v126
    %v235 = vunpack.c.l.b16 %v127
    %v236 = vunpack.c.h.b16 %v127
    %v237 = vunpack.c.l.b16 %v128
    %v238 = vunpack.c.h.b16 %v128
    %v239 = vunpack.c.l.b16 %v129
    %v240 = vunpack.c.h.b16 %v129
    %v241 = vunpack.c.l.b16 %v130
    %v242 = vunpack.c.h.b16 %v130
    %v243 = vunpack.c.l.b16 %v131
    %v244 = vunpack.c.h.b16 %v131
    %v245 = vunpack.c.l.b16 %v132
    %v246 = vunpack.c.h.b16 %v132
    %v247 = vunpack.c.l.b16 %v133
    %v248 = vunpack.c.h.b16 %v133
    %v249 = vunpack.c.l.b16 %v134
    %v250 = vunpack.c.h.b16 %v134
    %v251 = vunpack.c.l.b16 %v135
    %v252 = vunpack.c.h.b16 %v135
    %v253 = vunpack.c.l.b16 %v136
    %v254 = vunpack.c.h.b16 %v136
    %v255 = vpack.c.b16 %v195, %v191
    %v256 = vpack.c.b16 %v196, %v192
    %v257 = vpack.c.b16 %v197, %v193
    %v258 = vpack.c.b16 %v198, %v194
    %v259 = vpack.c.b16 %v203, %v199
    %v260 = vpack.c.b16 %v204, %v200
    %v261 = vpack.c.b16 %v205, %v201
    %v262 = vpack.c.b16 %v206, %v202
    %v263 = vpack.c.b16 %v211, %v207
    %v264 = vpack.c.b16 %v212, %v208
    %v265 = vpack.c.b16 %v213, %v209
    %v266 = vpack.c.b16 %v214, %v210
    %v267 = vpack.c.b16 %v219, %v215
    %v268 = vpack.c.b16 %v220, %v216
    %v269 = vpack.c.b16 %v221, %v217
    %v270 = vpack.c.b16 %v222, %v218
    %v271 = vpack.c.b16 %v227, %v223
    %v272 = vpack.c.b16 %v228, %v224
    %v273 = vpack.c.b16 %v229, %v225
    %v274 = vpack.c.b16 %v230, %v226
    %v275 = vpack.c.b16 %v235, %v231
    %v276 = vpack.c.b16 %v236, %v232
    %v277 = vpack.c.b16 %v237, %v233
    %v278 = vpack.c.b16 %v238, %v234
    %v279 = vpack.c.b16 %v243, %v239
    %v280 = vpack.c.b16 %v244, %v240
    %v281 = vpack.c.b16 %v245, %v241
    %v282 = vpack.c.b16 %v246, %v242
    %v283 = vpack.c.b16 %v251, %v247
    %v284 = vpack.c.b16 %v252, %v248
    %v285 = vpack.c.b16 %v253, %v249
    %v286 = vpack.c.b16 %v254, %v250
    %319 = vmatprep.subr.bf16.mxu0 %v256
    %320 = vmatpush1.bf16.msra.mxu0 %v255
    %321 = vmatprep.subr.bf16.mxu0 %v260
    %322 = vmatpush1.bf16.msra.mxu0 %v259
    %323 = vmatprep.subr.bf16.mxu0 %v264
    %324 = vmatpush1.bf16.msra.mxu0 %v263
    %325 = vmatprep.subr.bf16.mxu0 %v268
    %326 = vmatpush1.bf16.msra.mxu0 %v267
    %327 = vmatprep.subr.bf16.mxu0 %v272
    %328 = vmatpush1.bf16.msra.mxu0 %v271
    %329 = vmatprep.subr.bf16.mxu0 %v276
    %330 = vmatpush1.bf16.msra.mxu0 %v275
    %331 = vmatprep.subr.bf16.mxu0 %v280
    %332 = vmatpush1.bf16.msra.mxu0 %v279
    %333 = vmatprep.subr.bf16.mxu0 %v284
    %334 = vmatpush1.bf16.msra.mxu0 %v283
    %335 = vmatprep.subr.bf16.mxu0 0
    %336 = vmatpush1.bf16.msra.mxu0 0
    %337 = vmatprep.subr.bf16.mxu0 0
    %338 = vmatpush1.bf16.msra.mxu0 0
    %339 = vmatprep.subr.bf16.mxu0 0
    %340 = vmatpush1.bf16.msra.mxu0 0
    %341 = vmatprep.subr.bf16.mxu0 0
    %342 = vmatpush1.bf16.msra.mxu0 0
    %343 = vmatprep.subr.bf16.mxu0 0
    %344 = vmatpush1.bf16.msra.mxu0 0
    %345 = vmatprep.subr.bf16.mxu0 0
    %346 = vmatpush1.bf16.msra.mxu0 0
    %347 = vmatprep.subr.bf16.mxu0 0
    %348 = vmatpush1.bf16.msra.mxu0 0
    %349 = vmatprep.subr.bf16.mxu0 0
    %350 = vmatpush1.bf16.msra.mxu0 0
    %351 = vmatprep.mubr.bf16.mxu0 0
    %352 = vmatmul.mubr.bf16.gmra.mrb[0].mxu0 %v104
    %v353 = vpop.f32.mrb[0].mxu0
    %v354 = vadd.f32 %v142, %v353
    %v355 = vpop.f32.mrb[0].mxu0
    %v356 = vadd.f32 %v146, %v355
    %v357 = vpop.f32.mrb[0].mxu0
    %v358 = vpop.f32.mrb[0].mxu0
    %359 = vdwg.mxu0
    %360 = vmatprep.subr.bf16.mxu0 %v258
    %361 = vmatpush1.bf16.msra.mxu0 %v257
    %362 = vmatprep.subr.bf16.mxu0 %v262
    %363 = vmatpush1.bf16.msra.mxu0 %v261
    %364 = vmatprep.subr.bf16.mxu0 %v266
    %365 = vmatpush1.bf16.msra.mxu0 %v265
    %366 = vmatprep.subr.bf16.mxu0 %v270
    %367 = vmatpush1.bf16.msra.mxu0 %v269
    %368 = vmatprep.subr.bf16.mxu0 %v274
    %369 = vmatpush1.bf16.msra.mxu0 %v273
    %370 = vmatprep.subr.bf16.mxu0 %v278
    %371 = vmatpush1.bf16.msra.mxu0 %v277
    %372 = vmatprep.subr.bf16.mxu0 %v282
    %373 = vmatpush1.bf16.msra.mxu0 %v281
    %374 = vmatprep.subr.bf16.mxu0 %v286
    %375 = vmatpush1.bf16.msra.mxu0 %v285
    %376 = vmatprep.subr.bf16.mxu0 0
    %377 = vmatpush1.bf16.msra.mxu0 0
    %378 = vmatprep.subr.bf16.mxu0 0
    %379 = vmatpush1.bf16.msra.mxu0 0
    %380 = vmatprep.subr.bf16.mxu0 0
    %381 = vmatpush1.bf16.msra.mxu0 0
    %382 = vmatprep.subr.bf16.mxu0 0
    %383 = vmatpush1.bf16.msra.mxu0 0
    %384 = vmatprep.subr.bf16.mxu0 0
    %385 = vmatpush1.bf16.msra.mxu0 0
    %386 = vmatprep.subr.bf16.mxu0 0
    %387 = vmatpush1.bf16.msra.mxu0 0
    %388 = vmatprep.subr.bf16.mxu0 0
    %389 = vmatpush1.bf16.msra.mxu0 0
    %390 = vmatprep.subr.bf16.mxu0 0
    %391 = vmatpush1.bf16.msra.mxu0 0
    %392 = vmatprep.mubr.bf16.mxu0 0
    %393 = vmatmul.mubr.bf16.gmra.mrb[0].mxu0 %v104
    %v394 = vpop.f32.mrb[0].mxu0
    %v395 = vadd.f32 %v150, %v394
    %v396 = vpop.f32.mrb[0].mxu0
    %v397 = vadd.f32 %v154, %v396
    %v398 = vpop.f32.mrb[0].mxu0
    %v399 = vpop.f32.mrb[0].mxu0
    %400 = vdwg.mxu0
    %v401 = vmul.f32 %v354, 0.01
    %v402 = vmul.f32 %v356, 0.01
    %v403 = vmul.f32 %v395, 0.01
    %v404 = vmul.f32 %v397, 0.01
    %v405 = vmax.f32 %v354, %v401
    %v406 = vmax.f32 %v356, %v402
    %v407 = vmax.f32 %v395, %v403
    %v408 = vmax.f32 %v397, %v404
    %v409 = vpack.c.bf16 %v405, %v405
    %v410 = vpack.c.bf16 %v406, %v406
    %v411 = vpack.c.bf16 %v407, %v407
    %v412 = vpack.c.bf16 %v408, %v408
    %v413 = vld [vmem:[#allocation7] sm:$0xff]
    %v414 = vld [vmem:[#allocation7 + $0x8] sm:$0xff]
    %v415 = vld [vmem:[#allocation7 + $0x10] sm:$0xff]
    %v416 = vld [vmem:[#allocation7 + $0x18] sm:$0xff]
    %v417 = vld [vmem:[#allocation7 + $0x20] sm:$0xff]
    %v418 = vld [vmem:[#allocation7 + $0x28] sm:$0xff]
    %v419 = vld [vmem:[#allocation7 + $0x30] sm:$0xff]
    %v420 = vld [vmem:[#allocation7 + $0x38] sm:$0xff]
    %v421 = vld [vmem:[#allocation7 + $0x40] sm:$0xff]
    %v422 = vld [vmem:[#allocation7 + $0x48] sm:$0xff]
    %v423 = vld [vmem:[#allocation7 + $0x50] sm:$0xff]
    %v424 = vld [vmem:[#allocation7 + $0x58] sm:$0xff]
    %v425 = vld [vmem:[#allocation7 + $0x60] sm:$0xff]
    %v426 = vld [vmem:[#allocation7 + $0x68] sm:$0xff]
    %v427 = vld [vmem:[#allocation7 + $0x70] sm:$0xff]
    %v428 = vld [vmem:[#allocation7 + $0x78] sm:$0xff]
    %v429 = vld [vmem:[#allocation7 + $0x80] sm:$0xff]
    %v430 = vld [vmem:[#allocation7 + $0x88] sm:$0xff]
    %v431 = vld [vmem:[#allocation7 + $0x90] sm:$0xff]
    %v432 = vld [vmem:[#allocation7 + $0x98] sm:$0xff]
    %v433 = vld [vmem:[#allocation7 + $0xa0] sm:$0xff]
    %v434 = vld [vmem:[#allocation7 + $0xa8] sm:$0xff]
    %v435 = vld [vmem:[#allocation7 + $0xb0] sm:$0xff]
    %v436 = vld [vmem:[#allocation7 + $0xb8] sm:$0xff]
    %v437 = vld [vmem:[#allocation7 + $0xc0] sm:$0xff]
    %v438 = vld [vmem:[#allocation7 + $0xc8] sm:$0xff]
    %v439 = vld [vmem:[#allocation7 + $0xd0] sm:$0xff]
    %v440 = vld [vmem:[#allocation7 + $0xd8] sm:$0xff]
    %v441 = vld [vmem:[#allocation7 + $0xe0] sm:$0xff]
    %v442 = vld [vmem:[#allocation7 + $0xe8] sm:$0xff]
    %v443 = vld [vmem:[#allocation7 + $0xf0] sm:$0xff]
    %v444 = vld [vmem:[#allocation7 + $0xf8] sm:$0xff]
    %v445 = vld [vmem:[#allocation7 + $0x100] sm:$0xff]
    %v446 = vld [vmem:[#allocation7 + $0x108] sm:$0xff]
    %v447 = vld [vmem:[#allocation7 + $0x110] sm:$0xff]
    %v448 = vld [vmem:[#allocation7 + $0x118] sm:$0xff]
    %v449 = vld [vmem:[#allocation7 + $0x120] sm:$0xff]
    %v450 = vld [vmem:[#allocation7 + $0x128] sm:$0xff]
    %v451 = vld [vmem:[#allocation7 + $0x130] sm:$0xff]
    %v452 = vld [vmem:[#allocation7 + $0x138] sm:$0xff]
    %v453 = vld [vmem:[#allocation7 + $0x140] sm:$0xff]
    %v454 = vld [vmem:[#allocation7 + $0x148] sm:$0xff]
    %v455 = vld [vmem:[#allocation7 + $0x150] sm:$0xff]
    %v456 = vld [vmem:[#allocation7 + $0x158] sm:$0xff]
    %v457 = vld [vmem:[#allocation7 + $0x160] sm:$0xff]
    %v458 = vld [vmem:[#allocation7 + $0x168] sm:$0xff]
    %v459 = vld [vmem:[#allocation7 + $0x170] sm:$0xff]
    %v460 = vld [vmem:[#allocation7 + $0x178] sm:$0xff]
    %v461 = vld [vmem:[#allocation7 + $0x180] sm:$0xff]
    %v462 = vld [vmem:[#allocation7 + $0x188] sm:$0xff]
    %v463 = vld [vmem:[#allocation7 + $0x190] sm:$0xff]
    %v464 = vld [vmem:[#allocation7 + $0x198] sm:$0xff]
    %v465 = vld [vmem:[#allocation7 + $0x1a0] sm:$0xff]
    %v466 = vld [vmem:[#allocation7 + $0x1a8] sm:$0xff]
    %v467 = vld [vmem:[#allocation7 + $0x1b0] sm:$0xff]
    %v468 = vld [vmem:[#allocation7 + $0x1b8] sm:$0xff]
    %v469 = vld [vmem:[#allocation7 + $0x1c0] sm:$0xff]
    %v470 = vld [vmem:[#allocation7 + $0x1c8] sm:$0xff]
    %v471 = vld [vmem:[#allocation7 + $0x1d0] sm:$0xff]
    %v472 = vld [vmem:[#allocation7 + $0x1d8] sm:$0xff]
    %v473 = vld [vmem:[#allocation7 + $0x1e0] sm:$0xff]
    %v474 = vld [vmem:[#allocation7 + $0x1e8] sm:$0xff]
    %v475 = vld [vmem:[#allocation7 + $0x1f0] sm:$0xff]
    %v476 = vld [vmem:[#allocation7 + $0x1f8] sm:$0xff]
    %v477 = vld [vmem:[%s4] sm:$0x3]
    %v479 = vlaneseq
    %v480 = vshrl.u32 %v479, 7
    %v481 = vsub.s32 0, %v480
    %v482 = vrot.slane %v477, %v481
    %v483 = vlaneseq
    %v484 = vshrl.u32 %v483, 7
    %v485 = vsub.s32 1, %v484
    %v486 = vrot.slane %v477, %v485
    %v553 = vunpack.c.l.b16 %v413
    %v554 = vunpack.c.h.b16 %v413
    %v555 = vunpack.c.l.b16 %v414
    %v556 = vunpack.c.h.b16 %v414
    %v557 = vunpack.c.l.b16 %v415
    %v558 = vunpack.c.h.b16 %v415
    %v559 = vunpack.c.l.b16 %v416
    %v560 = vunpack.c.h.b16 %v416
    %v561 = vunpack.c.l.b16 %v417
    %v562 = vunpack.c.h.b16 %v417
    %v563 = vunpack.c.l.b16 %v418
    %v564 = vunpack.c.h.b16 %v418
    %v565 = vunpack.c.l.b16 %v419
    %v566 = vunpack.c.h.b16 %v419
    %v567 = vunpack.c.l.b16 %v420
    %v568 = vunpack.c.h.b16 %v420
    %v569 = vunpack.c.l.b16 %v421
    %v570 = vunpack.c.h.b16 %v421
    %v571 = vunpack.c.l.b16 %v422
    %v572 = vunpack.c.h.b16 %v422
    %v573 = vunpack.c.l.b16 %v423
    %v574 = vunpack.c.h.b16 %v423
    %v575 = vunpack.c.l.b16 %v424
    %v576 = vunpack.c.h.b16 %v424
    %v577 = vunpack.c.l.b16 %v425
    %v578 = vunpack.c.h.b16 %v425
    %v579 = vunpack.c.l.b16 %v426
    %v580 = vunpack.c.h.b16 %v426
    %v581 = vunpack.c.l.b16 %v427
    %v582 = vunpack.c.h.b16 %v427
    %v583 = vunpack.c.l.b16 %v428
    %v584 = vunpack.c.h.b16 %v428
    %v585 = vunpack.c.l.b16 %v429
    %v586 = vunpack.c.h.b16 %v429
    %v587 = vunpack.c.l.b16 %v430
    %v588 = vunpack.c.h.b16 %v430
    %v589 = vunpack.c.l.b16 %v431
    %v590 = vunpack.c.h.b16 %v431
    %v591 = vunpack.c.l.b16 %v432
    %v592 = vunpack.c.h.b16 %v432
    %v593 = vunpack.c.l.b16 %v433
    %v594 = vunpack.c.h.b16 %v433
    %v595 = vunpack.c.l.b16 %v434
    %v596 = vunpack.c.h.b16 %v434
    %v597 = vunpack.c.l.b16 %v435
    %v598 = vunpack.c.h.b16 %v435
    %v599 = vunpack.c.l.b16 %v436
    %v600 = vunpack.c.h.b16 %v436
    %v601 = vunpack.c.l.b16 %v437
    %v602 = vunpack.c.h.b16 %v437
    %v603 = vunpack.c.l.b16 %v438
    %v604 = vunpack.c.h.b16 %v438
    %v605 = vunpack.c.l.b16 %v439
    %v606 = vunpack.c.h.b16 %v439
    %v607 = vunpack.c.l.b16 %v440
    %v608 = vunpack.c.h.b16 %v440
    %v609 = vunpack.c.l.b16 %v441
    %v610 = vunpack.c.h.b16 %v441
    %v611 = vunpack.c.l.b16 %v442
    %v612 = vunpack.c.h.b16 %v442
    %v613 = vunpack.c.l.b16 %v443
    %v614 = vunpack.c.h.b16 %v443
    %v615 = vunpack.c.l.b16 %v444
    %v616 = vunpack.c.h.b16 %v444
    %v617 = vunpack.c.l.b16 %v445
    %v618 = vunpack.c.h.b16 %v445
    %v619 = vunpack.c.l.b16 %v446
    %v620 = vunpack.c.h.b16 %v446
    %v621 = vunpack.c.l.b16 %v447
    %v622 = vunpack.c.h.b16 %v447
    %v623 = vunpack.c.l.b16 %v448
    %v624 = vunpack.c.h.b16 %v448
    %v625 = vunpack.c.l.b16 %v449
    %v626 = vunpack.c.h.b16 %v449
    %v627 = vunpack.c.l.b16 %v450
    %v628 = vunpack.c.h.b16 %v450
    %v629 = vunpack.c.l.b16 %v451
    %v630 = vunpack.c.h.b16 %v451
    %v631 = vunpack.c.l.b16 %v452
    %v632 = vunpack.c.h.b16 %v452
    %v633 = vunpack.c.l.b16 %v453
    %v634 = vunpack.c.h.b16 %v453
    %v635 = vunpack.c.l.b16 %v454
    %v636 = vunpack.c.h.b16 %v454
    %v637 = vunpack.c.l.b16 %v455
    %v638 = vunpack.c.h.b16 %v455
    %v639 = vunpack.c.l.b16 %v456
    %v640 = vunpack.c.h.b16 %v456
    %v641 = vunpack.c.l.b16 %v457
    %v642 = vunpack.c.h.b16 %v457
    %v643 = vunpack.c.l.b16 %v458
    %v644 = vunpack.c.h.b16 %v458
    %v645 = vunpack.c.l.b16 %v459
    %v646 = vunpack.c.h.b16 %v459
    %v647 = vunpack.c.l.b16 %v460
    %v648 = vunpack.c.h.b16 %v460
    %v649 = vunpack.c.l.b16 %v461
    %v650 = vunpack.c.h.b16 %v461
    %v651 = vunpack.c.l.b16 %v462
    %v652 = vunpack.c.h.b16 %v462
    %v653 = vunpack.c.l.b16 %v463
    %v654 = vunpack.c.h.b16 %v463
    %v655 = vunpack.c.l.b16 %v464
    %v656 = vunpack.c.h.b16 %v464
    %v657 = vunpack.c.l.b16 %v465
    %v658 = vunpack.c.h.b16 %v465
    %v659 = vunpack.c.l.b16 %v466
    %v660 = vunpack.c.h.b16 %v466
    %v661 = vunpack.c.l.b16 %v467
    %v662 = vunpack.c.h.b16 %v467
    %v663 = vunpack.c.l.b16 %v468
    %v664 = vunpack.c.h.b16 %v468
    %v665 = vunpack.c.l.b16 %v469
    %v666 = vunpack.c.h.b16 %v469
    %v667 = vunpack.c.l.b16 %v470
    %v668 = vunpack.c.h.b16 %v470
    %v669 = vunpack.c.l.b16 %v471
    %v670 = vunpack.c.h.b16 %v471
    %v671 = vunpack.c.l.b16 %v472
    %v672 = vunpack.c.h.b16 %v472
    %v673 = vunpack.c.l.b16 %v473
    %v674 = vunpack.c.h.b16 %v473
    %v675 = vunpack.c.l.b16 %v474
    %v676 = vunpack.c.h.b16 %v474
    %v677 = vunpack.c.l.b16 %v475
    %v678 = vunpack.c.h.b16 %v475
    %v679 = vunpack.c.l.b16 %v476
    %v680 = vunpack.c.h.b16 %v476
    %v681 = vpack.c.b16 %v555, %v553
    %v682 = vpack.c.b16 %v556, %v554
    %v683 = vpack.c.b16 %v559, %v557
    %v684 = vpack.c.b16 %v560, %v558
    %v685 = vpack.c.b16 %v563, %v561
    %v686 = vpack.c.b16 %v564, %v562
    %v687 = vpack.c.b16 %v567, %v565
    %v688 = vpack.c.b16 %v568, %v566
    %v689 = vpack.c.b16 %v571, %v569
    %v690 = vpack.c.b16 %v572, %v570
    %v691 = vpack.c.b16 %v575, %v573
    %v692 = vpack.c.b16 %v576, %v574
    %v693 = vpack.c.b16 %v579, %v577
    %v694 = vpack.c.b16 %v580, %v578
    %v695 = vpack.c.b16 %v583, %v581
    %v696 = vpack.c.b16 %v584, %v582
    %v697 = vpack.c.b16 %v587, %v585
    %v698 = vpack.c.b16 %v588, %v586
    %v699 = vpack.c.b16 %v591, %v589
    %v700 = vpack.c.b16 %v592, %v590
    %v701 = vpack.c.b16 %v595, %v593
    %v702 = vpack.c.b16 %v596, %v594
    %v703 = vpack.c.b16 %v599, %v597
    %v704 = vpack.c.b16 %v600, %v598
    %v705 = vpack.c.b16 %v603, %v601
    %v706 = vpack.c.b16 %v604, %v602
    %v707 = vpack.c.b16 %v607, %v605
    %v708 = vpack.c.b16 %v608, %v606
    %v709 = vpack.c.b16 %v611, %v609
    %v710 = vpack.c.b16 %v612, %v610
    %v711 = vpack.c.b16 %v615, %v613
    %v712 = vpack.c.b16 %v616, %v614
    %v713 = vpack.c.b16 %v619, %v617
    %v714 = vpack.c.b16 %v620, %v618
    %v715 = vpack.c.b16 %v623, %v621
    %v716 = vpack.c.b16 %v624, %v622
    %v717 = vpack.c.b16 %v627, %v625
    %v718 = vpack.c.b16 %v628, %v626
    %v719 = vpack.c.b16 %v631, %v629
    %v720 = vpack.c.b16 %v632, %v630
    %v721 = vpack.c.b16 %v635, %v633
    %v722 = vpack.c.b16 %v636, %v634
    %v723 = vpack.c.b16 %v639, %v637
    %v724 = vpack.c.b16 %v640, %v638
    %v725 = vpack.c.b16 %v643, %v641
    %v726 = vpack.c.b16 %v644, %v642
    %v727 = vpack.c.b16 %v647, %v645
    %v728 = vpack.c.b16 %v648, %v646
    %v729 = vpack.c.b16 %v651, %v649
    %v730 = vpack.c.b16 %v652, %v650
    %v731 = vpack.c.b16 %v655, %v653
    %v732 = vpack.c.b16 %v656, %v654
    %v733 = vpack.c.b16 %v659, %v657
    %v734 = vpack.c.b16 %v660, %v658
    %v735 = vpack.c.b16 %v663, %v661
    %v736 = vpack.c.b16 %v664, %v662
    %v737 = vpack.c.b16 %v667, %v665
    %v738 = vpack.c.b16 %v668, %v666
    %v739 = vpack.c.b16 %v671, %v669
    %v740 = vpack.c.b16 %v672, %v670
    %v741 = vpack.c.b16 %v675, %v673
    %v742 = vpack.c.b16 %v676, %v674
    %v743 = vpack.c.b16 %v679, %v677
    %v744 = vpack.c.b16 %v680, %v678
    %809 = vmatprep.subr.bf16.mxu0 %v682
    %810 = vmatpush1.bf16.msra.mxu0 %v681
    %811 = vmatprep.subr.bf16.mxu0 %v684
    %812 = vmatpush1.bf16.msra.mxu0 %v683
    %813 = vmatprep.subr.bf16.mxu0 %v686
    %814 = vmatpush1.bf16.msra.mxu0 %v685
    %815 = vmatprep.subr.bf16.mxu0 %v688
    %816 = vmatpush1.bf16.msra.mxu0 %v687
    %817 = vmatprep.subr.bf16.mxu0 %v690
    %818 = vmatpush1.bf16.msra.mxu0 %v689
    %819 = vmatprep.subr.bf16.mxu0 %v692
    %820 = vmatpush1.bf16.msra.mxu0 %v691
    %821 = vmatprep.subr.bf16.mxu0 %v694
    %822 = vmatpush1.bf16.msra.mxu0 %v693
    %823 = vmatprep.subr.bf16.mxu0 %v696
    %824 = vmatpush1.bf16.msra.mxu0 %v695
    %825 = vmatprep.subr.bf16.mxu0 %v698
    %826 = vmatpush1.bf16.msra.mxu0 %v697
    %827 = vmatprep.subr.bf16.mxu0 %v700
    %828 = vmatpush1.bf16.msra.mxu0 %v699
    %829 = vmatprep.subr.bf16.mxu0 %v702
    %830 = vmatpush1.bf16.msra.mxu0 %v701
    %831 = vmatprep.subr.bf16.mxu0 %v704
    %832 = vmatpush1.bf16.msra.mxu0 %v703
    %833 = vmatprep.subr.bf16.mxu0 %v706
    %834 = vmatpush1.bf16.msra.mxu0 %v705
    %835 = vmatprep.subr.bf16.mxu0 %v708
    %836 = vmatpush1.bf16.msra.mxu0 %v707
    %837 = vmatprep.subr.bf16.mxu0 %v710
    %838 = vmatpush1.bf16.msra.mxu0 %v709
    %839 = vmatprep.subr.bf16.mxu0 %v712
    %840 = vmatpush1.bf16.msra.mxu0 %v711
    %841 = vmatprep.mubr.bf16.mxu0 %v410
    %842 = vmatmul.mubr.bf16.gmra.mrb[0].mxu0 %v409
    %v843 = vpop.f32.mrb[0].mxu0
    %v844 = vadd.f32 %v482, %v843
    %v845 = vpop.f32.mrb[0].mxu0
    %v846 = vadd.f32 %v486, %v845
    %v847 = vpop.f32.mrb[0].mxu0
    %v848 = vpop.f32.mrb[0].mxu0
    %849 = vdwg.mxu0
    %850 = vmatprep.subr.bf16.mxu0 %v714
    %851 = vmatpush1.bf16.msra.mxu0 %v713
    %852 = vmatprep.subr.bf16.mxu0 %v716
    %853 = vmatpush1.bf16.msra.mxu0 %v715
    %854 = vmatprep.subr.bf16.mxu0 %v718
    %855 = vmatpush1.bf16.msra.mxu0 %v717
    %856 = vmatprep.subr.bf16.mxu0 %v720
    %857 = vmatpush1.bf16.msra.mxu0 %v719
    %858 = vmatprep.subr.bf16.mxu0 %v722
    %859 = vmatpush1.bf16.msra.mxu0 %v721
    %860 = vmatprep.subr.bf16.mxu0 %v724
    %861 = vmatpush1.bf16.msra.mxu0 %v723
    %862 = vmatprep.subr.bf16.mxu0 %v726
    %863 = vmatpush1.bf16.msra.mxu0 %v725
    %864 = vmatprep.subr.bf16.mxu0 %v728
    %865 = vmatpush1.bf16.msra.mxu0 %v727
    %866 = vmatprep.subr.bf16.mxu0 %v730
    %867 = vmatpush1.bf16.msra.mxu0 %v729
    %868 = vmatprep.subr.bf16.mxu0 %v732
    %869 = vmatpush1.bf16.msra.mxu0 %v731
    %870 = vmatprep.subr.bf16.mxu0 %v734
    %871 = vmatpush1.bf16.msra.mxu0 %v733
    %872 = vmatprep.subr.bf16.mxu0 %v736
    %873 = vmatpush1.bf16.msra.mxu0 %v735
    %874 = vmatprep.subr.bf16.mxu0 %v738
    %875 = vmatpush1.bf16.msra.mxu0 %v737
    %876 = vmatprep.subr.bf16.mxu0 %v740
    %877 = vmatpush1.bf16.msra.mxu0 %v739
    %878 = vmatprep.subr.bf16.mxu0 %v742
    %879 = vmatpush1.bf16.msra.mxu0 %v741
    %880 = vmatprep.subr.bf16.mxu0 %v744
    %881 = vmatpush1.bf16.msra.mxu0 %v743
    %882 = vmatprep.mubr.bf16.mxu0 %v412
    %883 = vmatmul.mubr.bf16.gmra.mrb[0].mxu0 %v411
    %v884 = vpop.f32.mrb[0].mxu0
    %v885 = vadd.f32 %v844, %v884
    %v886 = vpop.f32.mrb[0].mxu0
    %v887 = vadd.f32 %v846, %v886
    %v888 = vpop.f32.mrb[0].mxu0
    %v889 = vpop.f32.mrb[0].mxu0
    %890 = vdwg.mxu0
    %v891 = vmul.f32 %v885, 0.01
    %v892 = vmul.f32 %v887, 0.01
    %v893 = vmax.f32 %v885, %v891
    %v894 = vmax.f32 %v887, %v892
    %895 = vst [vmem:[#allocation11] sm:$0xff] %v893
    %896 = vst [vmem:[#allocation11 + $0x8] sm:$0xff] %v894
    %v897 = vpack.c.bf16 %v893, %v893
    %v898 = vpack.c.bf16 %v894, %v894
    %v899 = vld [vmem:[#allocation8] sm:$0xff]
    %v900 = vld [vmem:[#allocation8 + $0x8] sm:$0xff]
    %v901 = vld [vmem:[#allocation8 + $0x10] sm:$0xff]
    %v902 = vld [vmem:[#allocation8 + $0x18] sm:$0xff]
    %v903 = vld [vmem:[#allocation8 + $0x20] sm:$0xff]
    %v904 = vld [vmem:[#allocation8 + $0x28] sm:$0xff]
    %v905 = vld [vmem:[#allocation8 + $0x30] sm:$0xff]
    %v906 = vld [vmem:[#allocation8 + $0x38] sm:$0xff]
    %v907 = vld [vmem:[#allocation8 + $0x40] sm:$0xff]
    %v908 = vld [vmem:[#allocation8 + $0x48] sm:$0xff]
    %v909 = vld [vmem:[#allocation8 + $0x50] sm:$0xff]
    %v910 = vld [vmem:[#allocation8 + $0x58] sm:$0xff]
    %v911 = vld [vmem:[#allocation8 + $0x60] sm:$0xff]
    %v912 = vld [vmem:[#allocation8 + $0x68] sm:$0xff]
    %v913 = vld [vmem:[#allocation8 + $0x70] sm:$0xff]
    %v914 = vld [vmem:[#allocation8 + $0x78] sm:$0xff]
    %v915 = vld [vmem:[#allocation8 + $0x80] sm:$0xff]
    %v916 = vld [vmem:[#allocation8 + $0x88] sm:$0xff]
    %v917 = vld [vmem:[#allocation8 + $0x90] sm:$0xff]
    %v918 = vld [vmem:[#allocation8 + $0x98] sm:$0xff]
    %v919 = vld [vmem:[#allocation8 + $0xa0] sm:$0xff]
    %v920 = vld [vmem:[#allocation8 + $0xa8] sm:$0xff]
    %v921 = vld [vmem:[#allocation8 + $0xb0] sm:$0xff]
    %v922 = vld [vmem:[#allocation8 + $0xb8] sm:$0xff]
    %v923 = vld [vmem:[#allocation8 + $0xc0] sm:$0xff]
    %v924 = vld [vmem:[#allocation8 + $0xc8] sm:$0xff]
    %v925 = vld [vmem:[#allocation8 + $0xd0] sm:$0xff]
    %v926 = vld [vmem:[#allocation8 + $0xd8] sm:$0xff]
    %v927 = vld [vmem:[#allocation8 + $0xe0] sm:$0xff]
    %v928 = vld [vmem:[#allocation8 + $0xe8] sm:$0xff]
    %v929 = vld [vmem:[#allocation8 + $0xf0] sm:$0xff]
    %v930 = vld [vmem:[#allocation8 + $0xf8] sm:$0xff]
    %v931 = vld [vmem:[%s6] sm:$0x3]
    %v933 = vlaneseq
    %v934 = vshrl.u32 %v933, 7
    %v935 = vsub.s32 0, %v934
    %v936 = vrot.slane %v931, %v935
    %v937 = vlaneseq
    %v938 = vshrl.u32 %v937, 7
    %v939 = vsub.s32 1, %v938
    %v940 = vrot.slane %v931, %v939
    %v975 = vunpack.c.l.b16 %v899
    %v976 = vunpack.c.h.b16 %v899
    %v977 = vunpack.c.l.b16 %v900
    %v978 = vunpack.c.h.b16 %v900
    %v979 = vunpack.c.l.b16 %v901
    %v980 = vunpack.c.h.b16 %v901
    %v981 = vunpack.c.l.b16 %v902
    %v982 = vunpack.c.h.b16 %v902
    %v983 = vunpack.c.l.b16 %v903
    %v984 = vunpack.c.h.b16 %v903
    %v985 = vunpack.c.l.b16 %v904
    %v986 = vunpack.c.h.b16 %v904
    %v987 = vunpack.c.l.b16 %v905
    %v988 = vunpack.c.h.b16 %v905
    %v989 = vunpack.c.l.b16 %v906
    %v990 = vunpack.c.h.b16 %v906
    %v991 = vunpack.c.l.b16 %v907
    %v992 = vunpack.c.h.b16 %v907
    %v993 = vunpack.c.l.b16 %v908
    %v994 = vunpack.c.h.b16 %v908
    %v995 = vunpack.c.l.b16 %v909
    %v996 = vunpack.c.h.b16 %v909
    %v997 = vunpack.c.l.b16 %v910
    %v998 = vunpack.c.h.b16 %v910
    %v999 = vunpack.c.l.b16 %v911
    %v1000 = vunpack.c.h.b16 %v911
    %v1001 = vunpack.c.l.b16 %v912
    %v1002 = vunpack.c.h.b16 %v912
    %v1003 = vunpack.c.l.b16 %v913
    %v1004 = vunpack.c.h.b16 %v913
    %v1005 = vunpack.c.l.b16 %v914
    %v1006 = vunpack.c.h.b16 %v914
    %v1007 = vunpack.c.l.b16 %v915
    %v1008 = vunpack.c.h.b16 %v915
    %v1009 = vunpack.c.l.b16 %v916
    %v1010 = vunpack.c.h.b16 %v916
    %v1011 = vunpack.c.l.b16 %v917
    %v1012 = vunpack.c.h.b16 %v917
    %v1013 = vunpack.c.l.b16 %v918
    %v1014 = vunpack.c.h.b16 %v918
    %v1015 = vunpack.c.l.b16 %v919
    %v1016 = vunpack.c.h.b16 %v919
    %v1017 = vunpack.c.l.b16 %v920
    %v1018 = vunpack.c.h.b16 %v920
    %v1019 = vunpack.c.l.b16 %v921
    %v1020 = vunpack.c.h.b16 %v921
    %v1021 = vunpack.c.l.b16 %v922
    %v1022 = vunpack.c.h.b16 %v922
    %v1023 = vunpack.c.l.b16 %v923
    %v1024 = vunpack.c.h.b16 %v923
    %v1025 = vunpack.c.l.b16 %v924
    %v1026 = vunpack.c.h.b16 %v924
    %v1027 = vunpack.c.l.b16 %v925
    %v1028 = vunpack.c.h.b16 %v925
    %v1029 = vunpack.c.l.b16 %v926
    %v1030 = vunpack.c.h.b16 %v926
    %v1031 = vunpack.c.l.b16 %v927
    %v1032 = vunpack.c.h.b16 %v927
    %v1033 = vunpack.c.l.b16 %v928
    %v1034 = vunpack.c.h.b16 %v928
    %v1035 = vunpack.c.l.b16 %v929
    %v1036 = vunpack.c.h.b16 %v929
    %v1037 = vunpack.c.l.b16 %v930
    %v1038 = vunpack.c.h.b16 %v930
    %v1039 = vpack.c.b16 %v977, %v975
    %v1040 = vpack.c.b16 %v978, %v976
    %v1041 = vpack.c.b16 %v981, %v979
    %v1042 = vpack.c.b16 %v982, %v980
    %v1043 = vpack.c.b16 %v985, %v983
    %v1044 = vpack.c.b16 %v986, %v984
    %v1045 = vpack.c.b16 %v989, %v987
    %v1046 = vpack.c.b16 %v990, %v988
    %v1047 = vpack.c.b16 %v993, %v991
    %v1048 = vpack.c.b16 %v994, %v992
    %v1049 = vpack.c.b16 %v997, %v995
    %v1050 = vpack.c.b16 %v998, %v996
    %v1051 = vpack.c.b16 %v1001, %v999
    %v1052 = vpack.c.b16 %v1002, %v1000
    %v1053 = vpack.c.b16 %v1005, %v1003
    %v1054 = vpack.c.b16 %v1006, %v1004
    %v1055 = vpack.c.b16 %v1009, %v1007
    %v1056 = vpack.c.b16 %v1010, %v1008
    %v1057 = vpack.c.b16 %v1013, %v1011
    %v1058 = vpack.c.b16 %v1014, %v1012
    %v1059 = vpack.c.b16 %v1017, %v1015
    %v1060 = vpack.c.b16 %v1018, %v1016
    %v1061 = vpack.c.b16 %v1021, %v1019
    %v1062 = vpack.c.b16 %v1022, %v1020
    %v1063 = vpack.c.b16 %v1025, %v1023
    %v1064 = vpack.c.b16 %v1026, %v1024
    %v1065 = vpack.c.b16 %v1029, %v1027
    %v1066 = vpack.c.b16 %v1030, %v1028
    %v1067 = vpack.c.b16 %v1033, %v1031
    %v1068 = vpack.c.b16 %v1034, %v1032
    %v1069 = vpack.c.b16 %v1037, %v1035
    %v1070 = vpack.c.b16 %v1038, %v1036
    %1103 = vmatprep.subr.bf16.mxu0 %v1040
    %1104 = vmatpush1.bf16.msra.mxu0 %v1039
    %1105 = vmatprep.subr.bf16.mxu0 %v1042
    %1106 = vmatpush1.bf16.msra.mxu0 %v1041
    %1107 = vmatprep.subr.bf16.mxu0 %v1044
    %1108 = vmatpush1.bf16.msra.mxu0 %v1043
    %1109 = vmatprep.subr.bf16.mxu0 %v1046
    %1110 = vmatpush1.bf16.msra.mxu0 %v1045
    %1111 = vmatprep.subr.bf16.mxu0 %v1048
    %1112 = vmatpush1.bf16.msra.mxu0 %v1047
    %1113 = vmatprep.subr.bf16.mxu0 %v1050
    %1114 = vmatpush1.bf16.msra.mxu0 %v1049
    %1115 = vmatprep.subr.bf16.mxu0 %v1052
    %1116 = vmatpush1.bf16.msra.mxu0 %v1051
    %1117 = vmatprep.subr.bf16.mxu0 %v1054
    %1118 = vmatpush1.bf16.msra.mxu0 %v1053
    %1119 = vmatprep.subr.bf16.mxu0 %v1056
    %1120 = vmatpush1.bf16.msra.mxu0 %v1055
    %1121 = vmatprep.subr.bf16.mxu0 %v1058
    %1122 = vmatpush1.bf16.msra.mxu0 %v1057
    %1123 = vmatprep.subr.bf16.mxu0 %v1060
    %1124 = vmatpush1.bf16.msra.mxu0 %v1059
    %1125 = vmatprep.subr.bf16.mxu0 %v1062
    %1126 = vmatpush1.bf16.msra.mxu0 %v1061
    %1127 = vmatprep.subr.bf16.mxu0 %v1064
    %1128 = vmatpush1.bf16.msra.mxu0 %v1063
    %1129 = vmatprep.subr.bf16.mxu0 %v1066
    %1130 = vmatpush1.bf16.msra.mxu0 %v1065
    %1131 = vmatprep.subr.bf16.mxu0 %v1068
    %1132 = vmatpush1.bf16.msra.mxu0 %v1067
    %1133 = vmatprep.subr.bf16.mxu0 %v1070
    %1134 = vmatpush1.bf16.msra.mxu0 %v1069
    %1135 = vmatprep.mubr.bf16.mxu0 %v898
    %1136 = vmatmul.mubr.bf16.gmra.mrb[0].mxu0 %v897
    %v1137 = vpop.f32.mrb[0].mxu0
    %v1138 = vadd.f32 %v936, %v1137
    %v1139 = vpop.f32.mrb[0].mxu0
    %v1140 = vadd.f32 %v940, %v1139
    %v1141 = vpop.f32.mrb[0].mxu0
    %v1142 = vpop.f32.mrb[0].mxu0
    %1143 = vdwg.mxu0
    %v1144 = vmul.f32 %v1138, 0.01
    %v1145 = vmul.f32 %v1140, 0.01
    %v1146 = vmax.f32 %v1138, %v1144
    %v1147 = vmax.f32 %v1140, %v1145
    %v1148 = vpack.c.bf16 %v1146, %v1146
    %v1149 = vld [vmem:[#allocation10] sm:$0xf]
    %v1150 = vld [vmem:[#allocation10 + $0x4] sm:$0xf]
    %v1151 = vld [vmem:[#allocation10 + $0x8] sm:$0xf]
    %v1152 = vld [vmem:[#allocation10 + $0xc] sm:$0xf]
    %v1153 = vld [vmem:[#allocation10 + $0x10] sm:$0xf]
    %v1154 = vld [vmem:[#allocation10 + $0x14] sm:$0xf]
    %v1155 = vld [vmem:[#allocation10 + $0x18] sm:$0xf]
    %v1156 = vld [vmem:[#allocation10 + $0x1c] sm:$0xf]
    %v1157 = vld [vmem:[#allocation10 + $0x20] sm:$0xf]
    %v1158 = vld [vmem:[#allocation10 + $0x24] sm:$0xf]
    %v1159 = vld [vmem:[#allocation10 + $0x28] sm:$0xf]
    %v1160 = vld [vmem:[#allocation10 + $0x2c] sm:$0xf]
    %v1161 = vld [vmem:[#allocation10 + $0x30] sm:$0xf]
    %v1162 = vld [vmem:[#allocation10 + $0x34] sm:$0xf]
    %v1163 = vld [vmem:[#allocation10 + $0x38] sm:$0xf]
    %v1164 = vld [vmem:[#allocation10 + $0x3c] sm:$0xf]
    %v1165 = vld [vmem:[%s8] sm:$0x1]
    %v1167 = vlaneseq
    %v1168 = vshrl.u32 %v1167, 7
    %v1169 = vsub.s32 0, %v1168
    %v1170 = vrot.slane %v1165, %v1169
    %v1188 = vunpack.c.l.b16 %v1149
    %v1189 = vunpack.c.l.b16 %v1150
    %v1190 = vunpack.c.l.b16 %v1151
    %v1191 = vunpack.c.l.b16 %v1152
    %v1192 = vunpack.c.l.b16 %v1153
    %v1193 = vunpack.c.l.b16 %v1154
    %v1194 = vunpack.c.l.b16 %v1155
    %v1195 = vunpack.c.l.b16 %v1156
    %v1196 = vunpack.c.l.b16 %v1157
    %v1197 = vunpack.c.l.b16 %v1158
    %v1198 = vunpack.c.l.b16 %v1159
    %v1199 = vunpack.c.l.b16 %v1160
    %v1200 = vunpack.c.l.b16 %v1161
    %v1201 = vunpack.c.l.b16 %v1162
    %v1202 = vunpack.c.l.b16 %v1163
    %v1203 = vunpack.c.l.b16 %v1164
    %v1204 = vpack.c.b16 %v1189, %v1188
    %v1205 = vpack.c.b16 %v1191, %v1190
    %v1206 = vpack.c.b16 %v1193, %v1192
    %v1207 = vpack.c.b16 %v1195, %v1194
    %v1208 = vpack.c.b16 %v1197, %v1196
    %v1209 = vpack.c.b16 %v1199, %v1198
    %v1210 = vpack.c.b16 %v1201, %v1200
    %v1211 = vpack.c.b16 %v1203, %v1202
    %1220 = vmatprep.subr.bf16.mxu0 0
    %1221 = vmatpush1.bf16.msra.mxu0 %v1204
    %1222 = vmatprep.subr.bf16.mxu0 0
    %1223 = vmatpush1.bf16.msra.mxu0 %v1205
    %1224 = vmatprep.subr.bf16.mxu0 0
    %1225 = vmatpush1.bf16.msra.mxu0 %v1206
    %1226 = vmatprep.subr.bf16.mxu0 0
    %1227 = vmatpush1.bf16.msra.mxu0 %v1207
    %1228 = vmatprep.subr.bf16.mxu0 0
    %1229 = vmatpush1.bf16.msra.mxu0 %v1208
    %1230 = vmatprep.subr.bf16.mxu0 0
    %1231 = vmatpush1.bf16.msra.mxu0 %v1209
    %1232 = vmatprep.subr.bf16.mxu0 0
    %1233 = vmatpush1.bf16.msra.mxu0 %v1210
    %1234 = vmatprep.subr.bf16.mxu0 0
    %1235 = vmatpush1.bf16.msra.mxu0 %v1211
    %1236 = vmatprep.subr.bf16.mxu0 0
    %1237 = vmatpush1.bf16.msra.mxu0 0
    %1238 = vmatprep.subr.bf16.mxu0 0
    %1239 = vmatpush1.bf16.msra.mxu0 0
    %1240 = vmatprep.subr.bf16.mxu0 0
    %1241 = vmatpush1.bf16.msra.mxu0 0
    %1242 = vmatprep.subr.bf16.mxu0 0
    %1243 = vmatpush1.bf16.msra.mxu0 0
    %1244 = vmatprep.subr.bf16.mxu0 0
    %1245 = vmatpush1.bf16.msra.mxu0 0
    %1246 = vmatprep.subr.bf16.mxu0 0
    %1247 = vmatpush1.bf16.msra.mxu0 0
    %1248 = vmatprep.subr.bf16.mxu0 0
    %1249 = vmatpush1.bf16.msra.mxu0 0
    %1250 = vmatprep.subr.bf16.mxu0 0
    %1251 = vmatpush1.bf16.msra.mxu0 0
    %1252 = vmatprep.mubr.bf16.mxu0 0
    %1253 = vmatmul.mubr.bf16.gmra.mrb[0].mxu0 %v1148
    %v1254 = vpop.f32.mrb[0].mxu0
    %v1255 = vadd.f32 %v1170, %v1254
    %v1256 = vpop.f32.mrb[0].mxu0
    %v1257 = vpop.f32.mrb[0].mxu0
    %v1258 = vpop.f32.mrb[0].mxu0
    %1259 = vdwg.mxu0
    %1260 = vst [vmem:[#allocation12] sm:$0xff] %v1255
    %v1261 = vpack.c.bf16 %v1147, %v1147
    %s1262 = scalar_lea.vmem [#allocation10], 64
    %v1263 = vld [vmem:[%s1262] sm:$0xf]
    %v1264 = vld [vmem:[%s1262 + $0x4] sm:$0xf]
    %v1265 = vld [vmem:[%s1262 + $0x8] sm:$0xf]
    %v1266 = vld [vmem:[%s1262 + $0xc] sm:$0xf]
    %v1267 = vld [vmem:[%s1262 + $0x10] sm:$0xf]
    %v1268 = vld [vmem:[%s1262 + $0x14] sm:$0xf]
    %v1269 = vld [vmem:[%s1262 + $0x18] sm:$0xf]
    %v1270 = vld [vmem:[%s1262 + $0x1c] sm:$0xf]
    %v1271 = vld [vmem:[%s1262 + $0x20] sm:$0xf]
    %v1272 = vld [vmem:[%s1262 + $0x24] sm:$0xf]
    %v1273 = vld [vmem:[%s1262 + $0x28] sm:$0xf]
    %v1274 = vld [vmem:[%s1262 + $0x2c] sm:$0xf]
    %v1275 = vld [vmem:[%s1262 + $0x30] sm:$0xf]
    %v1276 = vld [vmem:[%s1262 + $0x34] sm:$0xf]
    %v1277 = vld [vmem:[%s1262 + $0x38] sm:$0xf]
    %v1278 = vld [vmem:[%s1262 + $0x3c] sm:$0xf]
    %s1279 = scalar_lea.vmem %s8, 1
    %v1280 = vld [vmem:[%s1279] sm:$0x1]
    %v1282 = vlaneseq
    %v1283 = vshrl.u32 %v1282, 7
    %v1284 = vsub.s32 0, %v1283
    %v1285 = vrot.slane %v1280, %v1284
    %v1303 = vunpack.c.l.b16 %v1263
    %v1304 = vunpack.c.l.b16 %v1264
    %v1305 = vunpack.c.l.b16 %v1265
    %v1306 = vunpack.c.l.b16 %v1266
    %v1307 = vunpack.c.l.b16 %v1267
    %v1308 = vunpack.c.l.b16 %v1268
    %v1309 = vunpack.c.l.b16 %v1269
    %v1310 = vunpack.c.l.b16 %v1270
    %v1311 = vunpack.c.l.b16 %v1271
    %v1312 = vunpack.c.l.b16 %v1272
    %v1313 = vunpack.c.l.b16 %v1273
    %v1314 = vunpack.c.l.b16 %v1274
    %v1315 = vunpack.c.l.b16 %v1275
    %v1316 = vunpack.c.l.b16 %v1276
    %v1317 = vunpack.c.l.b16 %v1277
    %v1318 = vunpack.c.l.b16 %v1278
    %v1319 = vpack.c.b16 %v1304, %v1303
    %v1320 = vpack.c.b16 %v1306, %v1305
    %v1321 = vpack.c.b16 %v1308, %v1307
    %v1322 = vpack.c.b16 %v1310, %v1309
    %v1323 = vpack.c.b16 %v1312, %v1311
    %v1324 = vpack.c.b16 %v1314, %v1313
    %v1325 = vpack.c.b16 %v1316, %v1315
    %v1326 = vpack.c.b16 %v1318, %v1317
    %1335 = vmatprep.subr.bf16.mxu0 0
    %1336 = vmatpush1.bf16.msra.mxu0 %v1319
    %1337 = vmatprep.subr.bf16.mxu0 0
    %1338 = vmatpush1.bf16.msra.mxu0 %v1320
    %1339 = vmatprep.subr.bf16.mxu0 0
    %1340 = vmatpush1.bf16.msra.mxu0 %v1321
    %1341 = vmatprep.subr.bf16.mxu0 0
    %1342 = vmatpush1.bf16.msra.mxu0 %v1322
    %1343 = vmatprep.subr.bf16.mxu0 0
    %1344 = vmatpush1.bf16.msra.mxu0 %v1323
    %1345 = vmatprep.subr.bf16.mxu0 0
    %1346 = vmatpush1.bf16.msra.mxu0 %v1324
    %1347 = vmatprep.subr.bf16.mxu0 0
    %1348 = vmatpush1.bf16.msra.mxu0 %v1325
    %1349 = vmatprep.subr.bf16.mxu0 0
    %1350 = vmatpush1.bf16.msra.mxu0 %v1326
    %1351 = vmatprep.subr.bf16.mxu0 0
    %1352 = vmatpush1.bf16.msra.mxu0 0
    %1353 = vmatprep.subr.bf16.mxu0 0
    %1354 = vmatpush1.bf16.msra.mxu0 0
    %1355 = vmatprep.subr.bf16.mxu0 0
    %1356 = vmatpush1.bf16.msra.mxu0 0
    %1357 = vmatprep.subr.bf16.mxu0 0
    %1358 = vmatpush1.bf16.msra.mxu0 0
    %1359 = vmatprep.subr.bf16.mxu0 0
    %1360 = vmatpush1.bf16.msra.mxu0 0
    %1361 = vmatprep.subr.bf16.mxu0 0
    %1362 = vmatpush1.bf16.msra.mxu0 0
    %1363 = vmatprep.subr.bf16.mxu0 0
    %1364 = vmatpush1.bf16.msra.mxu0 0
    %1365 = vmatprep.subr.bf16.mxu0 0
    %1366 = vmatpush1.bf16.msra.mxu0 0
    %1367 = vmatprep.mubr.bf16.mxu0 0
    %1368 = vmatmul.mubr.bf16.gmra.mrb[0].mxu0 %v1261
    %v1369 = vpop.f32.mrb[0].mxu0
    %v1370 = vadd.f32 %v1285, %v1369
    %v1371 = vpop.f32.mrb[0].mxu0
    %v1372 = vpop.f32.mrb[0].mxu0
    %v1373 = vpop.f32.mrb[0].mxu0
    %1374 = vdwg.mxu0
    %1375 = vst [vmem:[#allocation12 + $0x8] sm:$0xff] %v1370
    // Predicated region
    $region58: #{tpu_custom_call.1} parent=1 // pred_check
      _
    $region59: #{tpu_custom_call.1} parent=1 // pred_check_branch
      %1377 = sbr.rel (0) target = $region61
    $region60: #{tpu_custom_call.1} parent=1 // pred_region
      %s1379 = ssub.s32 256, 256
      %1380 = vsyncadd [#allocation4], %s1379
      %s1382 = sshll.u32 [#allocation11], 4
      %s1383 = int_to_ptr.vmem [resolvable:$true] %s1382
      %1385 = dma.vmem_to_hbm [thread:$0]  %s1383, 256, %s9, [#allocation4]
    $region61: #{tpu_custom_call.1} parent=1 // pred_fallthru
      _
    // Predicated region
    $region62: #{tpu_custom_call.1} parent=1 // pred_check
      _
    $region63: #{tpu_custom_call.1} parent=1 // pred_check_branch
      %1387 = sbr.rel (0) target = $region65
    $region64: #{tpu_custom_call.1} parent=1 // pred_region
      %s1389 = ssub.s32 256, 256
      %1390 = vsyncadd [#allocation13], %s1389
      %s1392 = sshll.u32 [#allocation12], 4
      %s1393 = int_to_ptr.vmem [resolvable:$true] %s1392
      %1395 = dma.vmem_to_hbm [thread:$0]  %s1393, 256, %s10, [#allocation13]
    $region65: #{tpu_custom_call.1} parent=1 // pred_fallthru
      _
    // Predicated region
    $region66: #{tpu_custom_call.1} parent=1 // pred_check
      _
    $region67: #{tpu_custom_call.1} parent=1 // pred_check_branch
      %1397 = sbr.rel (0) target = $region69
    $region68: #{tpu_custom_call.1} parent=1 // pred_region
      %1398 = dma.done [#allocation4], 256
    $region69: #{tpu_custom_call.1} parent=1 // pred_fallthru
      _
    // Predicated region
    $region70: #{tpu_custom_call.1} parent=1 // pred_check
      _
    $region71: #{tpu_custom_call.1} parent=1 // pred_check_branch
      %1400 = sbr.rel (0) target = $region73
    $region72: #{tpu_custom_call.1} parent=1 // pred_region
      %1401 = dma.done [#allocation13], 256
    $region73: #{tpu_custom_call.1} parent=1 // pred_fallthru
      _
    %1402 = vsyncpa [#allocation3], 1
    %1403 = vsyncpa [#allocation6], 1
    %1404 = vsyncpa [#allocation9], 1
    %1405 = vsyncpa [#allocation4], 1
    %1406 = vsyncpa [#allocation13], 1

</llo_original>
